<compile_context>
chip_gen: v7x
topology: tpu7x:2x2x1
jax: 0.10.0
libtpu: 0.0.40
codegen_flags: <defaults>
</compile_context>

<pallas_src>
import math
from functools import partial

import numpy as np
import jax
import jax.numpy as jnp
from jax.experimental import pallas as pl
from jax.experimental.pallas import tpu as pltpu


# ---------------------------------------------------------------------------
# Fused kernel: [nearest resize] -> GroupNorm -> SiLU -> Conv2d(3x3, pad=1)
# for one sample, in (C, H*W) layout (channels on sublanes, space on lanes).
# ---------------------------------------------------------------------------
def _block_kernel(*refs, groups, eps, target_w, fuse_resize, mxu_dtype,
                  approx_silu):
    if fuse_resize:
        (src_ref, sel_ref, gamma_ref, beta_ref, w_ref, b_ref,
         mask_ref, gat_ref, sct_ref, o_ref) = refs
    else:
        (src_ref, gamma_ref, beta_ref, w_ref, b_ref,
         mask_ref, gat_ref, sct_ref, o_ref) = refs
        sel_ref = None

    Cout, HW = o_ref.shape[1], o_ref.shape[2]
    Cin = gamma_ref.shape[0]
    cs = Cin // groups

    src = src_ref[0].astype(jnp.float32)                  # (Cin, HWs) or (Cin, HW)

    # ---- nearest resize fused as an exact 0/1 selection matmul (f32) ----
    if fuse_resize:
        x = jnp.dot(src, sel_ref[...], preferred_element_type=jnp.float32)
    else:
        x = src                                            # (Cin, HW)

    # ---- GroupNorm: two-pass (stable) stats via tiny one-hot matmuls ----
    inv_n = 1.0 / float(HW * cs)
    gat = gat_ref[...]                                     # (G, Cin) one-hot
    sct = sct_ref[...]                                     # (Cin, G) one-hot
    ch_sum = jnp.sum(x, axis=1, keepdims=True)             # (Cin, 1)  lane reduce
    g_mean = jnp.dot(gat, ch_sum, preferred_element_type=jnp.float32) * inv_n
    mean_c = jnp.dot(sct, g_mean, preferred_element_type=jnp.float32)  # (Cin, 1)
    xc = x - mean_c
    ch_var = jnp.sum(xc * xc, axis=1, keepdims=True)       # (Cin, 1)
    g_var = jnp.dot(gat, ch_var, preferred_element_type=jnp.float32) * inv_n
    g_rstd = jax.lax.rsqrt(g_var + eps)
    rstd_c = jnp.dot(sct, g_rstd, preferred_element_type=jnp.float32)  # (Cin, 1)

    # fold norm + affine into one per-channel FMA on the big tile
    scale = rstd_c * gamma_ref[...]                        # (Cin, 1)
    xn = xc * scale + beta_ref[...]

    # ---- SiLU: x * sigmoid(x); reciprocal on the EUP slot when approx ----
    act = xn * pl.reciprocal(1.0 + jnp.exp(-xn), approx=approx_silu)

    # ---- 3x3 conv (pad=1): 9 rolled+masked taps, one K=9*Cin matmul ----
    masks = mask_ref[...]                                  # (9, HW) resident
    taps = []
    for k in range(9):
        dy, dx = k // 3 - 1, k % 3 - 1
        d = dy * target_w + dx
        t = act if d == 0 else pltpu.roll(act, shift=(-d) % HW, axis=1)
        if not (dy == 0 and dx == 0):
            t = t * masks[k:k + 1, :]                      # zero out-of-image taps
        taps.append(t)

    w_mx = w_ref[...]                                      # (Cout, 9*Cin) resident
    if Cin <= 128:
        # single big-K MXU matmul
        stacked = jnp.concatenate(taps, axis=0).astype(mxu_dtype)   # (9*Cin, HW)
        conv = jnp.dot(w_mx, stacked, preferred_element_type=jnp.float32)
    else:
        # fallback: 9 accumulating matmuls (stacked taps would be 9x activation)
        conv = jnp.zeros((Cout, HW), jnp.float32)
        for k in range(9):
            conv = conv + jnp.dot(w_mx[:, k * Cin:(k + 1) * Cin],
                                  taps[k].astype(mxu_dtype),
                                  preferred_element_type=jnp.float32)

    # single lane-dense store (HW is a multiple of 128 in practice)
    o_ref[0] = (conv + b_ref[...]).astype(o_ref.dtype)


# ---------------------------------------------------------------------------
# Wrappers
# ---------------------------------------------------------------------------
_SEL_FUSE_MAX_BYTES = 8 * 1024 * 1024   # cap for the resident selection matrix


def _nearest_indices(out_size, in_size):
    # PyTorch F.interpolate(mode='nearest'): src = floor(dst * in / out)
    return (np.arange(out_size) * in_size) // out_size


def _nearest_resize_nchw(x, target):
    B, C, H, W = x.shape
    if H == target and W == target:
        return x
    idx_h = (jnp.arange(target) * H) // target
    idx_w = (jnp.arange(target) * W) // target
    return x[:, :, idx_h][:, :, :, idx_w]


def _const_spec(shape):
    n = len(shape)
    return pl.BlockSpec(shape, lambda i: (0,) * n)


def block_forward(fmap_nchw, gamma, beta, w, b, *, target, groups=8, eps=1e-5,
                  mxu_dtype=jnp.bfloat16):
    """Block(GroupNorm->SiLU->Conv3x3) applied to fmap nearest-resized to
    (target, target); one fused pallas_call, grid over batch."""
    B, Cin, Hs, Ws = fmap_nchw.shape
    Cout = w.shape[0]
    assert Cin % groups == 0, "GroupNorm requires groups | Cin"
    Ht = Wt = int(target)
    HWt = Ht * Wt

    need_resize = (Hs, Ws) != (Ht, Wt)
    fuse_resize = need_resize and (Hs * Ws * HWt * 4 <= _SEL_FUSE_MAX_BYTES)
    if need_resize and not fuse_resize:
        # TODO(synk): for huge fmaps, DMA-gather source rows instead of
        # materializing the resized map in HBM.
        fmap_nchw = _nearest_resize_nchw(fmap_nchw, Ht)
        Hs, Ws = Ht, Wt
    HWs = Hs * Ws

    # NCHW -> (B, C, H*W) is a free reshape in this layout (no transpose pass).
    src = fmap_nchw.reshape(B, Cin, HWs)

    # ---- host-precomputed tiny resident constants ----
    if fuse_resize:
        ih = _nearest_indices(Ht, Hs)
        iw = _nearest_indices(Wt, Ws)
        flat = (ih[:, None] * Ws + iw[None, :]).reshape(HWt)
        sel_np = (np.arange(HWs)[:, None] == flat[None, :]).astype(np.float32)
    hh = np.arange(HWt) // Wt
    ww = np.arange(HWt) % Wt
    mask_np = np.stack(
        [((hh + dy >= 0) & (hh + dy < Ht) & (ww + dx >= 0) & (ww + dx < Wt))
         .astype(np.float32)
         for dy in (-1, 0, 1) for dx in (-1, 0, 1)], axis=0)            # (9, HWt)
    grp = np.arange(Cin) // (Cin // groups)
    gat_np = (grp[None, :] == np.arange(groups)[:, None]).astype(np.float32)
    sct_np = np.ascontiguousarray(gat_np.T)

    # weight tap-major: w_flat[co, (ky*3+kx)*Cin + ci] = w[co, ci, ky, kx]
    w_flat = jnp.transpose(w, (0, 2, 3, 1)).reshape(Cout, 9 * Cin).astype(mxu_dtype)
    gamma2 = gamma.reshape(Cin, 1).astype(jnp.float32)
    beta2 = beta.reshape(Cin, 1).astype(jnp.float32)
    b2 = b.reshape(Cout, 1).astype(jnp.float32)

    kernel = partial(_block_kernel, groups=groups, eps=eps, target_w=Wt,
                     fuse_resize=fuse_resize, mxu_dtype=mxu_dtype,
                     approx_silu=(mxu_dtype == jnp.bfloat16))

    in_specs = [pl.BlockSpec((1, Cin, HWs), lambda i: (i, 0, 0))]
    args = [src]
    if fuse_resize:
        in_specs.append(_const_spec((HWs, HWt)))
        args.append(jnp.asarray(sel_np))
    in_specs += [_const_spec((Cin, 1)), _const_spec((Cin, 1)),
                 _const_spec((Cout, 9 * Cin)), _const_spec((Cout, 1)),
                 _const_spec((9, HWt)), _const_spec((groups, Cin)),
                 _const_spec((Cin, groups))]
    args += [gamma2, beta2, w_flat, b2,
             jnp.asarray(mask_np), jnp.asarray(gat_np), jnp.asarray(sct_np)]

    out = pl.pallas_call(
        kernel,
        out_shape=jax.ShapeDtypeStruct((B, Cout, HWt), jnp.float32),
        grid_spec=pltpu.PrefetchScalarGridSpec(
            num_scalar_prefetch=0,
            grid=(B,),
            in_specs=in_specs,
            out_specs=pl.BlockSpec((1, Cout, HWt), lambda i: (i, 0, 0)),
        ),
        compiler_params=pltpu.CompilerParams(
            dimension_semantics=("parallel",),
            vmem_limit_bytes=32 * 1024 * 1024),
    )(*args)

    # (B, Cout, H*W) -> NCHW: free reshape
    return out.reshape(B, Cout, Ht, Wt)


def upsample_combiner_forward(x, fmaps, block_params, *, enabled=True, groups=8,
                              mxu_dtype=jnp.bfloat16):
    """Pallas port of UpsampleCombiner.forward."""
    fmaps = tuple(fmaps) if fmaps is not None else tuple()
    if (not enabled) or len(fmaps) == 0 or len(block_params) == 0:
        return x
    target = x.shape[-1]
    outs = [block_forward(f, p["gamma"], p["beta"], p["w"], p["b"],
                          target=target, groups=groups, mxu_dtype=mxu_dtype)
            for f, p in zip(fmaps, block_params)]
    # final channel concat is pure data movement; left to XLA
    return jnp.concatenate((x, *outs), axis=1)


# ---------------------------------------------------------------------------
# Pure-JAX reference (mirrors the PyTorch module)
# ---------------------------------------------------------------------------
def _reference_block(f, gamma, beta, w, b, *, groups=8, eps=1e-5):
    B, C, H, W = f.shape
    cs = C // groups
    xg = f.reshape(B, groups, cs * H * W)
    mean = jnp.mean(xg, axis=-1, keepdims=True)
    var = jnp.mean((xg - mean) ** 2, axis=-1, keepdims=True)
    xn = ((xg - mean) / jnp.sqrt(var + eps)).reshape(B, C, H, W)
    xn = xn * gamma[None, :, None, None] + beta[None, :, None, None]
    a = xn * jax.nn.sigmoid(xn)
    out = jax.lax.conv_general_dilated(
        a, w, window_strides=(1, 1), padding=((1, 1), (1, 1)),
        dimension_numbers=("NCHW", "OIHW", "NCHW"))
    return out + b[None, :, None, None]


def _reference_combiner(x, fmaps, params, *, groups=8):
    target = x.shape[-1]
    outs = [_reference_block(_nearest_resize_nchw(f, target),
                             p["gamma"], p["beta"], p["w"], p["b"], groups=groups)
            for f, p in zip(fmaps, params)]
    return jnp.concatenate((x, *outs), axis=1)


# ---------------------------------------------------------------------------
if __name__ == "__main__":
    key = jax.random.PRNGKey(0)
    B = 2
    dim = 8               # channels of x (passed through unchanged)
    target = 16           # spatial size of x
    groups = 8
    dim_ins = (8, 16, 8)
    dim_outs = (4, 8, 4)
    fmap_sizes = (8, 32, 16)   # upsample, downsample, already-at-target

    keys = jax.random.split(key, 1 + 5 * len(dim_ins))
    x = jax.random.normal(keys[0], (B, dim, target, target), dtype=jnp.float32)

    fmaps, params = [], []
    k = 1
    for ci, co, s in zip(dim_ins, dim_outs, fmap_sizes):
        fmaps.append(jax.random.normal(keys[k], (B, ci, s, s), dtype=jnp.float32))
        params.append(dict(
            gamma=1.0 + 0.1 * jax.random.normal(keys[k + 1], (ci,), dtype=jnp.float32),
            beta=0.1 * jax.random.normal(keys[k + 2], (ci,), dtype=jnp.float32),
            w=jax.random.normal(keys[k + 3], (co, ci, 3, 3), dtype=jnp.float32)
              / math.sqrt(9.0 * ci),
            b=0.01 * jax.random.normal(keys[k + 4], (co,), dtype=jnp.float32),
        ))
        k += 5

    ref = _reference_combiner(x, fmaps, params, groups=groups)

    # default (perf) config: bf16 MXU operands + approx-reciprocal SiLU
    out = upsample_combiner_forward(x, fmaps, params, enabled=True, groups=groups,
                                    mxu_dtype=jnp.bfloat16)
    out = jax.block_until_ready(out)
    assert out.shape == (B, dim + sum(dim_outs), target, target), out.shape
    err_bf16 = float(jnp.max(jnp.abs(out - ref)))
    assert err_bf16 < 6e-2, f"bf16 path mismatch vs reference, max abs err = {err_bf16}"

    # strict correctness check: f32 MXU operands, exact SiLU
    out32 = upsample_combiner_forward(x, fmaps, params, enabled=True, groups=groups,
                                      mxu_dtype=jnp.float32)
    out32 = jax.block_until_ready(out32)
    err_f32 = float(jnp.max(jnp.abs(out32 - ref)))
    assert err_f32 < 3e-3, f"f32 path mismatch vs reference, max abs err = {err_f32}"

    # disabled / no-fmaps path returns x unchanged (module semantics)
    passthrough = upsample_combiner_forward(x, [], params, enabled=True, groups=groups)
    assert passthrough is x

    print("KERNEL_OK")
</pallas_src>

<mosaic_0001>
module attributes {stable_mosaic.version = 11 : i64} {
  func.func @_block_kernel(%arg0: i32, %arg1: memref<1x8x64xf32, #tpu.memory_space<vmem>>, %arg2: memref<64x256xf32, #tpu.memory_space<vmem>>, %arg3: memref<8x1xf32, #tpu.memory_space<vmem>>, %arg4: memref<8x1xf32, #tpu.memory_space<vmem>>, %arg5: memref<4x72xbf16, #tpu.memory_space<vmem>>, %arg6: memref<4x1xf32, #tpu.memory_space<vmem>>, %arg7: memref<9x256xf32, #tpu.memory_space<vmem>>, %arg8: memref<8x8xf32, #tpu.memory_space<vmem>>, %arg9: memref<8x8xf32, #tpu.memory_space<vmem>>, %arg10: memref<1x4x256xf32, #tpu.memory_space<vmem>>) attributes {dimension_semantics = [#tpu.dimension_semantics<parallel>], iteration_bounds = array<i64: 2>, scalar_prefetch = 0 : i64, scratch_operands = 0 : i64, tpu.core_type = #tpu.core_type<tc>, window_params = [{transform_indices = @transform_0, window_bounds = array<i64: 1, 8, 64>}, {pipeline_mode = #tpu.pipeline_mode<synchronous>, transform_indices = @transform_1, window_bounds = array<i64: 64, 256>}, {pipeline_mode = #tpu.pipeline_mode<synchronous>, transform_indices = @transform_2, window_bounds = array<i64: 8, 1>}, {pipeline_mode = #tpu.pipeline_mode<synchronous>, transform_indices = @transform_3, window_bounds = array<i64: 8, 1>}, {pipeline_mode = #tpu.pipeline_mode<synchronous>, transform_indices = @transform_4, window_bounds = array<i64: 4, 72>}, {pipeline_mode = #tpu.pipeline_mode<synchronous>, transform_indices = @transform_5, window_bounds = array<i64: 4, 1>}, {pipeline_mode = #tpu.pipeline_mode<synchronous>, transform_indices = @transform_6, window_bounds = array<i64: 9, 256>}, {pipeline_mode = #tpu.pipeline_mode<synchronous>, transform_indices = @transform_7, window_bounds = array<i64: 8, 8>}, {pipeline_mode = #tpu.pipeline_mode<synchronous>, transform_indices = @transform_8, window_bounds = array<i64: 8, 8>}, {transform_indices = @transform_9, window_bounds = array<i64: 1, 4, 256>}]} {
    %c0 = arith.constant 0 : index
    %c0_0 = arith.constant 0 : index
    %c0_1 = arith.constant 0 : index
    %0 = vector.load %arg1[%c0, %c0_0, %c0_1] : memref<1x8x64xf32, #tpu.memory_space<vmem>>, vector<1x8x64xf32>
    %1 = vector.shape_cast %0 : vector<1x8x64xf32> to vector<8x64xf32>
    %c0_2 = arith.constant 0 : index
    %c0_3 = arith.constant 0 : index
    %2 = vector.load %arg2[%c0_2, %c0_3] : memref<64x256xf32, #tpu.memory_space<vmem>>, vector<64x256xf32>
    %cst = arith.constant dense<0.000000e+00> : vector<8x256xf32>
    %3 = tpu.matmul %1, %2, %cst {dimension_numbers = #tpu.dot_dimension_numbers<[1], [0], [0], [1], [0, 0, 1, 1], [], []>} : vector<8x64xf32>, vector<64x256xf32>, vector<8x256xf32> -> vector<8x256xf32>
    %c0_4 = arith.constant 0 : index
    %c0_5 = arith.constant 0 : index
    %4 = vector.load %arg8[%c0_4, %c0_5] : memref<8x8xf32, #tpu.memory_space<vmem>>, vector<8x8xf32>
    %c0_6 = arith.constant 0 : index
    %c0_7 = arith.constant 0 : index
    %5 = vector.load %arg9[%c0_6, %c0_7] : memref<8x8xf32, #tpu.memory_space<vmem>>, vector<8x8xf32>
    %cst_8 = arith.constant dense<0.000000e+00> : vector<8xf32>
    %6 = vector.multi_reduction <add>, %3, %cst_8 [1] : vector<8x256xf32> to vector<8xf32>
    %7 = vector.shape_cast %6 : vector<8xf32> to vector<8x1xf32>
    %cst_9 = arith.constant dense<0.000000e+00> : vector<8x1xf32>
    %8 = tpu.matmul %4, %7, %cst_9 {dimension_numbers = #tpu.dot_dimension_numbers<[1], [0], [0], [1], [0, 0, 1, 1], [], []>} : vector<8x8xf32>, vector<8x1xf32>, vector<8x1xf32> -> vector<8x1xf32>
    %cst_10 = arith.constant 3.906250e-03 : f32
    %9 = vector.broadcast %cst_10 : f32 to vector<8x1xf32>
    %10 = arith.mulf %8, %9 : vector<8x1xf32>
    %cst_11 = arith.constant dense<0.000000e+00> : vector<8x1xf32>
    %11 = tpu.matmul %5, %10, %cst_11 {dimension_numbers = #tpu.dot_dimension_numbers<[1], [0], [0], [1], [0, 0, 1, 1], [], []>} : vector<8x8xf32>, vector<8x1xf32>, vector<8x1xf32> -> vector<8x1xf32>
    %12 = vector.broadcast %11 : vector<8x1xf32> to vector<8x256xf32>
    %13 = arith.subf %3, %12 : vector<8x256xf32>
    %14 = arith.mulf %13, %13 : vector<8x256xf32>
    %cst_12 = arith.constant dense<0.000000e+00> : vector<8xf32>
    %15 = vector.multi_reduction <add>, %14, %cst_12 [1] : vector<8x256xf32> to vector<8xf32>
    %16 = vector.shape_cast %15 : vector<8xf32> to vector<8x1xf32>
    %cst_13 = arith.constant dense<0.000000e+00> : vector<8x1xf32>
    %17 = tpu.matmul %4, %16, %cst_13 {dimension_numbers = #tpu.dot_dimension_numbers<[1], [0], [0], [1], [0, 0, 1, 1], [], []>} : vector<8x8xf32>, vector<8x1xf32>, vector<8x1xf32> -> vector<8x1xf32>
    %cst_14 = arith.constant 3.906250e-03 : f32
    %18 = vector.broadcast %cst_14 : f32 to vector<8x1xf32>
    %19 = arith.mulf %17, %18 : vector<8x1xf32>
    %cst_15 = arith.constant 9.99999974E-6 : f32
    %20 = vector.broadcast %cst_15 : f32 to vector<8x1xf32>
    %21 = arith.addf %19, %20 : vector<8x1xf32>
    %22 = math.rsqrt %21 : vector<8x1xf32>
    %cst_16 = arith.constant dense<0.000000e+00> : vector<8x1xf32>
    %23 = tpu.matmul %5, %22, %cst_16 {dimension_numbers = #tpu.dot_dimension_numbers<[1], [0], [0], [1], [0, 0, 1, 1], [], []>} : vector<8x8xf32>, vector<8x1xf32>, vector<8x1xf32> -> vector<8x1xf32>
    %c0_17 = arith.constant 0 : index
    %c0_18 = arith.constant 0 : index
    %24 = vector.load %arg3[%c0_17, %c0_18] : memref<8x1xf32, #tpu.memory_space<vmem>>, vector<8x1xf32>
    %25 = arith.mulf %23, %24 : vector<8x1xf32>
    %26 = vector.broadcast %25 : vector<8x1xf32> to vector<8x256xf32>
    %27 = arith.mulf %13, %26 : vector<8x256xf32>
    %c0_19 = arith.constant 0 : index
    %c0_20 = arith.constant 0 : index
    %28 = vector.load %arg4[%c0_19, %c0_20] : memref<8x1xf32, #tpu.memory_space<vmem>>, vector<8x1xf32>
    %29 = vector.broadcast %28 : vector<8x1xf32> to vector<8x256xf32>
    %30 = arith.addf %27, %29 : vector<8x256xf32>
    %cst_21 = arith.constant 0.000000e+00 : f32
    %31 = vector.broadcast %cst_21 : f32 to vector<8x256xf32>
    %32 = arith.subf %31, %30 : vector<8x256xf32>
    %33 = math.exp %32 : vector<8x256xf32>
    %cst_22 = arith.constant 1.000000e+00 : f32
    %34 = vector.broadcast %cst_22 : f32 to vector<8x256xf32>
    %35 = arith.addf %34, %33 : vector<8x256xf32>
    %36 = tpu.reciprocal %35 {approx = true} : vector<8x256xf32> -> vector<8x256xf32>
    %37 = arith.mulf %30, %36 : vector<8x256xf32>
    %c0_23 = arith.constant 0 : index
    %c0_24 = arith.constant 0 : index
    %38 = vector.load %arg7[%c0_23, %c0_24] : memref<9x256xf32, #tpu.memory_space<vmem>>, vector<9x256xf32>
    %c17_i32 = arith.constant 17 : i32
    %39 = tpu.dynamic_rotate %37 by %c17_i32 dim 1 : vector<8x256xf32>, i32 -> vector<8x256xf32>
    %40 = vector.extract_strided_slice %38 {offsets = [0, 0], sizes = [1, 256], strides = [1, 1]} : vector<9x256xf32> to vector<1x256xf32>
    %41 = vector.broadcast %40 : vector<1x256xf32> to vector<8x256xf32>
    %42 = arith.mulf %39, %41 : vector<8x256xf32>
    %c16_i32 = arith.constant 16 : i32
    %43 = tpu.dynamic_rotate %37 by %c16_i32 dim 1 : vector<8x256xf32>, i32 -> vector<8x256xf32>
    %44 = vector.extract_strided_slice %38 {offsets = [1, 0], sizes = [1, 256], strides = [1, 1]} : vector<9x256xf32> to vector<1x256xf32>
    %45 = vector.broadcast %44 : vector<1x256xf32> to vector<8x256xf32>
    %46 = arith.mulf %43, %45 : vector<8x256xf32>
    %c15_i32 = arith.constant 15 : i32
    %47 = tpu.dynamic_rotate %37 by %c15_i32 dim 1 : vector<8x256xf32>, i32 -> vector<8x256xf32>
    %48 = vector.extract_strided_slice %38 {offsets = [2, 0], sizes = [1, 256], strides = [1, 1]} : vector<9x256xf32> to vector<1x256xf32>
    %49 = vector.broadcast %48 : vector<1x256xf32> to vector<8x256xf32>
    %50 = arith.mulf %47, %49 : vector<8x256xf32>
    %c1_i32 = arith.constant 1 : i32
    %51 = tpu.dynamic_rotate %37 by %c1_i32 dim 1 : vector<8x256xf32>, i32 -> vector<8x256xf32>
    %52 = vector.extract_strided_slice %38 {offsets = [3, 0], sizes = [1, 256], strides = [1, 1]} : vector<9x256xf32> to vector<1x256xf32>
    %53 = vector.broadcast %52 : vector<1x256xf32> to vector<8x256xf32>
    %54 = arith.mulf %51, %53 : vector<8x256xf32>
    %c255_i32 = arith.constant 255 : i32
    %55 = tpu.dynamic_rotate %37 by %c255_i32 dim 1 : vector<8x256xf32>, i32 -> vector<8x256xf32>
    %56 = vector.extract_strided_slice %38 {offsets = [5, 0], sizes = [1, 256], strides = [1, 1]} : vector<9x256xf32> to vector<1x256xf32>
    %57 = vector.broadcast %56 : vector<1x256xf32> to vector<8x256xf32>
    %58 = arith.mulf %55, %57 : vector<8x256xf32>
    %c241_i32 = arith.constant 241 : i32
    %59 = tpu.dynamic_rotate %37 by %c241_i32 dim 1 : vector<8x256xf32>, i32 -> vector<8x256xf32>
    %60 = vector.extract_strided_slice %38 {offsets = [6, 0], sizes = [1, 256], strides = [1, 1]} : vector<9x256xf32> to vector<1x256xf32>
    %61 = vector.broadcast %60 : vector<1x256xf32> to vector<8x256xf32>
    %62 = arith.mulf %59, %61 : vector<8x256xf32>
    %c240_i32 = arith.constant 240 : i32
    %63 = tpu.dynamic_rotate %37 by %c240_i32 dim 1 : vector<8x256xf32>, i32 -> vector<8x256xf32>
    %64 = vector.extract_strided_slice %38 {offsets = [7, 0], sizes = [1, 256], strides = [1, 1]} : vector<9x256xf32> to vector<1x256xf32>
    %65 = vector.broadcast %64 : vector<1x256xf32> to vector<8x256xf32>
    %66 = arith.mulf %63, %65 : vector<8x256xf32>
    %c239_i32 = arith.constant 239 : i32
    %67 = tpu.dynamic_rotate %37 by %c239_i32 dim 1 : vector<8x256xf32>, i32 -> vector<8x256xf32>
    %68 = vector.extract_strided_slice %38 {offsets = [8, 0], sizes = [1, 256], strides = [1, 1]} : vector<9x256xf32> to vector<1x256xf32>
    %69 = vector.broadcast %68 : vector<1x256xf32> to vector<8x256xf32>
    %70 = arith.mulf %67, %69 : vector<8x256xf32>
    %c0_25 = arith.constant 0 : index
    %c0_26 = arith.constant 0 : index
    %71 = vector.load %arg5[%c0_25, %c0_26] : memref<4x72xbf16, #tpu.memory_space<vmem>>, vector<4x72xbf16>
    %72 = tpu.concatenate %42, %46, %50, %54, %37, %58, %62, %66, %70 in 0 : vector<8x256xf32>, vector<8x256xf32>, vector<8x256xf32>, vector<8x256xf32>, vector<8x256xf32>, vector<8x256xf32>, vector<8x256xf32>, vector<8x256xf32>, vector<8x256xf32> -> vector<72x256xf32>
    %73 = arith.truncf %72 : vector<72x256xf32> to vector<72x256xbf16>
    %cst_27 = arith.constant dense<0.000000e+00> : vector<4x256xf32>
    %74 = tpu.matmul %71, %73, %cst_27 {dimension_numbers = #tpu.dot_dimension_numbers<[1], [0], [0], [1], [0, 0, 1, 1], [], []>} : vector<4x72xbf16>, vector<72x256xbf16>, vector<4x256xf32> -> vector<4x256xf32>
    %c0_28 = arith.constant 0 : index
    %c0_29 = arith.constant 0 : index
    %75 = vector.load %arg6[%c0_28, %c0_29] : memref<4x1xf32, #tpu.memory_space<vmem>>, vector<4x1xf32>
    %76 = vector.broadcast %75 : vector<4x1xf32> to vector<4x256xf32>
    %77 = arith.addf %74, %76 : vector<4x256xf32>
    %c0_30 = arith.constant 0 : index
    %c0_31 = arith.constant 0 : index
    %c0_32 = arith.constant 0 : index
    %78 = vector.load %arg10[%c0_30, %c0_31, %c0_32] : memref<1x4x256xf32, #tpu.memory_space<vmem>>, vector<1x4x256xf32>
    %79 = vector.shape_cast %78 : vector<1x4x256xf32> to vector<4x256xf32>
    %80 = vector.shape_cast %77 : vector<4x256xf32> to vector<1x4x256xf32>
    tpu.vector_store %arg10[%c0_30, %c0_31, %c0_32], %80 {strides = array<i32>} : memref<1x4x256xf32, #tpu.memory_space<vmem>>, vector<1x4x256xf32>,
    return
  }
  func.func @transform_0(%arg0: i32) -> (i32, i32, i32) {
    %c0_i32 = arith.constant 0 : i32
    %c0_i32_0 = arith.constant 0 : i32
    %c0_i32_1 = arith.constant 0 : i32
    return %arg0, %c0_i32, %c0_i32_0 : i32, i32, i32
  }
  func.func @transform_1(%arg0: i32) -> (i32, i32) {
    %c0_i32 = arith.constant 0 : i32
    %c0_i32_0 = arith.constant 0 : i32
    %c0_i32_1 = arith.constant 0 : i32
    return %c0_i32, %c0_i32_0 : i32, i32
  }
  func.func @transform_2(%arg0: i32) -> (i32, i32) {
    %c0_i32 = arith.constant 0 : i32
    %c0_i32_0 = arith.constant 0 : i32
    %c0_i32_1 = arith.constant 0 : i32
    return %c0_i32, %c0_i32_0 : i32, i32
  }
  func.func @transform_3(%arg0: i32) -> (i32, i32) {
    %c0_i32 = arith.constant 0 : i32
    %c0_i32_0 = arith.constant 0 : i32
    %c0_i32_1 = arith.constant 0 : i32
    return %c0_i32, %c0_i32_0 : i32, i32
  }
  func.func @transform_4(%arg0: i32) -> (i32, i32) {
    %c0_i32 = arith.constant 0 : i32
    %c0_i32_0 = arith.constant 0 : i32
    %c0_i32_1 = arith.constant 0 : i32
    return %c0_i32, %c0_i32_0 : i32, i32
  }
  func.func @transform_5(%arg0: i32) -> (i32, i32) {
    %c0_i32 = arith.constant 0 : i32
    %c0_i32_0 = arith.constant 0 : i32
    %c0_i32_1 = arith.constant 0 : i32
    return %c0_i32, %c0_i32_0 : i32, i32
  }
  func.func @transform_6(%arg0: i32) -> (i32, i32) {
    %c0_i32 = arith.constant 0 : i32
    %c0_i32_0 = arith.constant 0 : i32
    %c0_i32_1 = arith.constant 0 : i32
    return %c0_i32, %c0_i32_0 : i32, i32
  }
  func.func @transform_7(%arg0: i32) -> (i32, i32) {
    %c0_i32 = arith.constant 0 : i32
    %c0_i32_0 = arith.constant 0 : i32
    %c0_i32_1 = arith.constant 0 : i32
    return %c0_i32, %c0_i32_0 : i32, i32
  }
  func.func @transform_8(%arg0: i32) -> (i32, i32) {
    %c0_i32 = arith.constant 0 : i32
    %c0_i32_0 = arith.constant 0 : i32
    %c0_i32_1 = arith.constant 0 : i32
    return %c0_i32, %c0_i32_0 : i32, i32
  }
  func.func @transform_9(%arg0: i32) -> (i32, i32, i32) {
    %c0_i32 = arith.constant 0 : i32
    %c0_i32_0 = arith.constant 0 : i32
    %c0_i32_1 = arith.constant 0 : i32
    return %arg0, %c0_i32, %c0_i32_0 : i32, i32, i32
  }
}

</mosaic_0001>

<llo_original>
// kernel: tpu_custom_call.1
$region0: #{tpu_custom_call.1}
  #allocation0 [shape = 'u32[]', space=smem, size = 0x4, offset = 0x4, fixed_abs, tag = 'smem constant byte address 0x4 - core index']
  #allocation1 [shape = 'u32[144,128]{1,0:T(1,128)}', space=vmem, size = 0x12000, scoped, tag = 'internal scratch']
  %s0 = inlined_call_operand.hbm [shape: f32[2,8,64], index: 0, kind: input, shape index: {}]
  %s1 = inlined_call_operand.hbm [shape: f32[64,256], index: 1, kind: input, shape index: {}]
  %s2 = inlined_call_operand.vmem [shape: f32[8,1], index: 2, kind: input, shape index: {}]
  %s3 = inlined_call_operand.vmem [shape: f32[8,1], index: 3, kind: input, shape index: {}]
  %s4 = inlined_call_operand.hbm [shape: bf16[4,72], index: 4, kind: input, shape index: {}]
  %s5 = inlined_call_operand.vmem [shape: f32[4,1], index: 5, kind: input, shape index: {}]
  %s6 = inlined_call_operand.vmem [shape: f32[9,256], index: 6, kind: input, shape index: {}]
  %s7 = inlined_call_operand.vmem [shape: f32[8,8], index: 7, kind: input, shape index: {}]
  %s8 = inlined_call_operand.vmem [shape: f32[8,8], index: 8, kind: input, shape index: {}]
  %s9 = inlined_call_operand.hbm [shape: f32[2,4,256], index: 9, kind: output, shape index: {}]
  %s10 = sld [smem:[#allocation0]]
  $region81: #{tpu_custom_call.1} parent=0
    _
  %s12 = ssub.s32 1, %s10
  %s13 = scalar_select 0, %s12, %s10
  $region1: #{tpu_custom_call.1} parent=0
    #allocation2 [shape = 'u8[8192]{0}', space=vmem, size = 0x2000, scoped, tag = 'input window, operand 0']
    #allocation3 [shape = 's32[2]{0}', space=sflag, size = 0x8, scoped, tag = 'scoped memory for tpu_custom_call.1']
    #allocation4 [shape = 's32[2]{0}', space=sflag, size = 0x8, scoped, tag = 'scoped memory for tpu_custom_call.1']
    #allocation5 [shape = 'u8[65536]{0}', space=vmem, size = 0x10000, scoped, tag = 'input window, operand 1, single buffered']
    #allocation6 [shape = 's32[1]{0}', space=sflag, size = 0x4, scoped, tag = 'scoped memory for tpu_custom_call.1']
    #allocation7 [shape = 'u8[1024]{0}', space=vmem, size = 0x400, scoped, tag = 'input window, operand 4, single buffered']
    #allocation8 [shape = 'u8[8192]{0}', space=vmem, size = 0x2000, scoped, tag = 'output window, operand 0']
    %14 = vsyncpa [#allocation3], 0
    %s15 = scalar_lea.sflag [#allocation3], 1
    %16 = vsyncpa %s15, 0
    %17 = vsyncpa [#allocation6], 0
    %18 = vsyncpa [#allocation4], 0
    %s19 = scalar_lea.sflag [#allocation4], 1
    %20 = vsyncpa %s19, 0
    loop: start=0, step=1, limit=4
    $region2: #{tpu_custom_call.1} parent=1 // loop_pre_header
      _
    $region3: #{tpu_custom_call.1} parent=1 // loop_header
      %s22 = sphi 0, %s26
      %p23 = scmp.ge.s32.totalorder %s22, 4
      %s32 = sphi 0, %s34
      %s35 = sphi 0, %s32
      %s36 = sphi 0, %s35
      %s52 = sphi 0, %s36
      %s56 = sphi 0, %s56
      %s58 = sphi 0, %s56
      %s59 = sphi 0, %s58
      %s73 = sphi 0, %s59
      %s77 = sphi 0, %s77
      %s79 = sphi 0, %s77
      %s80 = sphi 0, %s79
      %s94 = sphi 0, %s80
      %s98 = sphi 0, %s98
      %s100 = sphi 0, %s98
      %s101 = sphi 0, %s100
      %s115 = sphi 0, %s101
      %s119 = sphi 0, %s119
      %s121 = sphi 0, %s119
      %s122 = sphi 0, %s121
      %s136 = sphi 0, %s122
      %s140 = sphi 0, %s140
      %s142 = sphi 0, %s140
      %s143 = sphi 0, %s142
      %s157 = sphi 0, %s143
      %s161 = sphi 0, %s161
      %s163 = sphi 0, %s161
      %s164 = sphi 0, %s163
      %s178 = sphi 0, %s164
      %s182 = sphi 0, %s182
      %s184 = sphi 0, %s182
      %s185 = sphi 0, %s184
      %s199 = sphi 0, %s185
      %s203 = sphi 0, %s203
      %s205 = sphi 0, %s203
      %s206 = sphi 0, %s205
      %s220 = sphi 0, %s206
      %s226 = sphi 0, %s228
      %s229 = sphi 0, %s226
      %s230 = sphi 0, %s229
      %s246 = sphi 0, %s230
    $region4: #{tpu_custom_call.1} parent=1 // loop_header_branch
      %25 = sbr.rel (%p23) target = $region8
    $region5: #{tpu_custom_call.1} parent=1 // loop_body
      %s27 = ssub.s32 %s22, 1
      %s28 = ssub.s32 %s22, 2
      %s29 = sadd.s32 %s22, 1
      %s30 = ssub.s32 %s22, %s29
      %p31 = scmp.eq.s32.totalorder %s30, 0
      %s33 = sadd.s32 %s32, 1
      %s34 = scalar_select %p31, %s32, %s33
      %p37 = pneg %p31
      %p38 = scmp.eq.s32.totalorder %s22, 1
      %p39 = por %p37, %p38
      %p40 = scmp.ne.s32.totalorder %s32, %s35
      %p41 = scmp.eq.s32.totalorder %s22, 0
      %p42 = por %p40, %p41
      %p43 = scmp.ne.s32.totalorder %s32, %s35
      %p44 = scmp.eq.s32.totalorder %s27, 1
      %p45 = por %p43, %p44
      %p46 = scmp.ne.s32.totalorder %s35, %s36
      %p47 = scmp.eq.s32.totalorder %s27, 0
      %p48 = por %p46, %p47
      %p49 = scmp.ne.s32.totalorder %s35, %s36
      %p50 = scmp.eq.s32.totalorder %s28, 1
      %p51 = por %p49, %p50
      %p53 = scmp.ne.s32.totalorder %s36, %s52
      %p54 = scmp.eq.s32.totalorder %s28, 0
      %p55 = por %p53, %p54
      %s57 = sadd.s32 %s56, 1
      %p60 = scmp.eq.s32.totalorder %s22, 1
      %p61 = scmp.ne.s32.totalorder %s56, %s58
      %p62 = scmp.eq.s32.totalorder %s22, 0
      %p63 = por %p61, %p62
      %p64 = scmp.ne.s32.totalorder %s56, %s58
      %p65 = scmp.eq.s32.totalorder %s27, 1
      %p66 = por %p64, %p65
      %p67 = scmp.ne.s32.totalorder %s58, %s59
      %p68 = scmp.eq.s32.totalorder %s27, 0
      %p69 = por %p67, %p68
      %p70 = scmp.ne.s32.totalorder %s58, %s59
      %p71 = scmp.eq.s32.totalorder %s28, 1
      %p72 = por %p70, %p71
      %p74 = scmp.ne.s32.totalorder %s59, %s73
      %p75 = scmp.eq.s32.totalorder %s28, 0
      %p76 = por %p74, %p75
      %s78 = sadd.s32 %s77, 1
      %p81 = scmp.eq.s32.totalorder %s22, 1
      %p82 = scmp.ne.s32.totalorder %s77, %s79
      %p83 = scmp.eq.s32.totalorder %s22, 0
      %p84 = por %p82, %p83
      %p85 = scmp.ne.s32.totalorder %s77, %s79
      %p86 = scmp.eq.s32.totalorder %s27, 1
      %p87 = por %p85, %p86
      %p88 = scmp.ne.s32.totalorder %s79, %s80
      %p89 = scmp.eq.s32.totalorder %s27, 0
      %p90 = por %p88, %p89
      %p91 = scmp.ne.s32.totalorder %s79, %s80
      %p92 = scmp.eq.s32.totalorder %s28, 1
      %p93 = por %p91, %p92
      %p95 = scmp.ne.s32.totalorder %s80, %s94
      %p96 = scmp.eq.s32.totalorder %s28, 0
      %p97 = por %p95, %p96
      %s99 = sadd.s32 %s98, 1
      %p102 = scmp.eq.s32.totalorder %s22, 1
      %p103 = scmp.ne.s32.totalorder %s98, %s100
      %p104 = scmp.eq.s32.totalorder %s22, 0
      %p105 = por %p103, %p104
      %p106 = scmp.ne.s32.totalorder %s98, %s100
      %p107 = scmp.eq.s32.totalorder %s27, 1
      %p108 = por %p106, %p107
      %p109 = scmp.ne.s32.totalorder %s100, %s101
      %p110 = scmp.eq.s32.totalorder %s27, 0
      %p111 = por %p109, %p110
      %p112 = scmp.ne.s32.totalorder %s100, %s101
      %p113 = scmp.eq.s32.totalorder %s28, 1
      %p114 = por %p112, %p113
      %p116 = scmp.ne.s32.totalorder %s101, %s115
      %p117 = scmp.eq.s32.totalorder %s28, 0
      %p118 = por %p116, %p117
      %s120 = sadd.s32 %s119, 1
      %p123 = scmp.eq.s32.totalorder %s22, 1
      %p124 = scmp.ne.s32.totalorder %s119, %s121
      %p125 = scmp.eq.s32.totalorder %s22, 0
      %p126 = por %p124, %p125
      %p127 = scmp.ne.s32.totalorder %s119, %s121
      %p128 = scmp.eq.s32.totalorder %s27, 1
      %p129 = por %p127, %p128
      %p130 = scmp.ne.s32.totalorder %s121, %s122
      %p131 = scmp.eq.s32.totalorder %s27, 0
      %p132 = por %p130, %p131
      %p133 = scmp.ne.s32.totalorder %s121, %s122
      %p134 = scmp.eq.s32.totalorder %s28, 1
      %p135 = por %p133, %p134
      %p137 = scmp.ne.s32.totalorder %s122, %s136
      %p138 = scmp.eq.s32.totalorder %s28, 0
      %p139 = por %p137, %p138
      %s141 = sadd.s32 %s140, 1
      %p144 = scmp.eq.s32.totalorder %s22, 1
      %p145 = scmp.ne.s32.totalorder %s140, %s142
      %p146 = scmp.eq.s32.totalorder %s22, 0
      %p147 = por %p145, %p146
      %p148 = scmp.ne.s32.totalorder %s140, %s142
      %p149 = scmp.eq.s32.totalorder %s27, 1
      %p150 = por %p148, %p149
      %p151 = scmp.ne.s32.totalorder %s142, %s143
      %p152 = scmp.eq.s32.totalorder %s27, 0
      %p153 = por %p151, %p152
      %p154 = scmp.ne.s32.totalorder %s142, %s143
      %p155 = scmp.eq.s32.totalorder %s28, 1
      %p156 = por %p154, %p155
      %p158 = scmp.ne.s32.totalorder %s143, %s157
      %p159 = scmp.eq.s32.totalorder %s28, 0
      %p160 = por %p158, %p159
      %s162 = sadd.s32 %s161, 1
      %p165 = scmp.eq.s32.totalorder %s22, 1
      %p166 = scmp.ne.s32.totalorder %s161, %s163
      %p167 = scmp.eq.s32.totalorder %s22, 0
      %p168 = por %p166, %p167
      %p169 = scmp.ne.s32.totalorder %s161, %s163
      %p170 = scmp.eq.s32.totalorder %s27, 1
      %p171 = por %p169, %p170
      %p172 = scmp.ne.s32.totalorder %s163, %s164
      %p173 = scmp.eq.s32.totalorder %s27, 0
      %p174 = por %p172, %p173
      %p175 = scmp.ne.s32.totalorder %s163, %s164
      %p176 = scmp.eq.s32.totalorder %s28, 1
      %p177 = por %p175, %p176
      %p179 = scmp.ne.s32.totalorder %s164, %s178
      %p180 = scmp.eq.s32.totalorder %s28, 0
      %p181 = por %p179, %p180
      %s183 = sadd.s32 %s182, 1
      %p186 = scmp.eq.s32.totalorder %s22, 1
      %p187 = scmp.ne.s32.totalorder %s182, %s184
      %p188 = scmp.eq.s32.totalorder %s22, 0
      %p189 = por %p187, %p188
      %p190 = scmp.ne.s32.totalorder %s182, %s184
      %p191 = scmp.eq.s32.totalorder %s27, 1
      %p192 = por %p190, %p191
      %p193 = scmp.ne.s32.totalorder %s184, %s185
      %p194 = scmp.eq.s32.totalorder %s27, 0
      %p195 = por %p193, %p194
      %p196 = scmp.ne.s32.totalorder %s184, %s185
      %p197 = scmp.eq.s32.totalorder %s28, 1
      %p198 = por %p196, %p197
      %p200 = scmp.ne.s32.totalorder %s185, %s199
      %p201 = scmp.eq.s32.totalorder %s28, 0
      %p202 = por %p200, %p201
      %s204 = sadd.s32 %s203, 1
      %p207 = scmp.eq.s32.totalorder %s22, 1
      %p208 = scmp.ne.s32.totalorder %s203, %s205
      %p209 = scmp.eq.s32.totalorder %s22, 0
      %p210 = por %p208, %p209
      %p211 = scmp.ne.s32.totalorder %s203, %s205
      %p212 = scmp.eq.s32.totalorder %s27, 1
      %p213 = por %p211, %p212
      %p214 = scmp.ne.s32.totalorder %s205, %s206
      %p215 = scmp.eq.s32.totalorder %s27, 0
      %p216 = por %p214, %p215
      %p217 = scmp.ne.s32.totalorder %s205, %s206
      %p218 = scmp.eq.s32.totalorder %s28, 1
      %p219 = por %p217, %p218
      %p221 = scmp.ne.s32.totalorder %s206, %s220
      %p222 = scmp.eq.s32.totalorder %s28, 0
      %p223 = por %p221, %p222
      %s224 = ssub.s32 %s22, %s29
      %p225 = scmp.eq.s32.totalorder %s224, 0
      %s227 = sadd.s32 %s226, 1
      %s228 = scalar_select %p225, %s226, %s227
      %p231 = pneg %p225
      %p232 = scmp.eq.s32.totalorder %s22, 1
      %p233 = por %p231, %p232
      %p234 = scmp.ne.s32.totalorder %s226, %s229
      %p235 = scmp.eq.s32.totalorder %s22, 0
      %p236 = por %p234, %p235
      %p237 = scmp.ne.s32.totalorder %s226, %s229
      %p238 = scmp.eq.s32.totalorder %s27, 1
      %p239 = por %p237, %p238
      %p240 = scmp.ne.s32.totalorder %s229, %s230
      %p241 = scmp.eq.s32.totalorder %s27, 0
      %p242 = por %p240, %p241
      %p243 = scmp.ne.s32.totalorder %s229, %s230
      %p244 = scmp.eq.s32.totalorder %s28, 1
      %p245 = por %p243, %p244
      %p247 = scmp.ne.s32.totalorder %s230, %s246
      %p248 = scmp.eq.s32.totalorder %s28, 0
      %p249 = por %p247, %p248
      %p250 = scmp.le.s32.totalorder 1, %s22
      %p251 = scmp.lt.s32.totalorder %s22, 3
      %p252 = pnand %p250, %p251
      %p253 = pneg %p252
      // Predicated region
      $region9: #{tpu_custom_call.1} parent=5 // pred_check
        _
      $region10: #{tpu_custom_call.1} parent=5 // pred_check_branch
        %255 = sbr.rel (%p252) target = $region12
      $region11: #{tpu_custom_call.1} parent=5 // pred_region
        %s256 = ssub.s32 %s22, 1
        // Predicated region
        $region13: #{tpu_custom_call.1} parent=11 // pred_check
          %p257 = pneg %p69
        $region14: #{tpu_custom_call.1} parent=11 // pred_check_branch
          %259 = sbr.rel (%p257) target = $region16
        $region15: #{tpu_custom_call.1} parent=11 // pred_region
          %s261 = ssub.s32 2048, 2048
          %262 = vsyncadd [#allocation6], %s261
          %s263 = sshll.u32 [#allocation5], 4
          %s264 = int_to_ptr.vmem [resolvable:$true] %s263
          %269 = dma.hbm_to_vmem [thread:$0]  %s1, 2048, %s264, [#allocation6], 256, 256, 16
        $region16: #{tpu_custom_call.1} parent=11 // pred_fallthru
          _
        // Predicated region
        $region17: #{tpu_custom_call.1} parent=11 // pred_check
          %p270 = pneg %p90
        $region18: #{tpu_custom_call.1} parent=11 // pred_check_branch
          %272 = sbr.rel (%p270) target = $region20
        $region19: #{tpu_custom_call.1} parent=11 // pred_region
          _
        $region20: #{tpu_custom_call.1} parent=11 // pred_fallthru
          _
        // Predicated region
        $region21: #{tpu_custom_call.1} parent=11 // pred_check
          %p273 = pneg %p111
        $region22: #{tpu_custom_call.1} parent=11 // pred_check_branch
          %275 = sbr.rel (%p273) target = $region24
        $region23: #{tpu_custom_call.1} parent=11 // pred_region
          _
        $region24: #{tpu_custom_call.1} parent=11 // pred_fallthru
          _
        // Predicated region
        $region25: #{tpu_custom_call.1} parent=11 // pred_check
          %p276 = pneg %p132
        $region26: #{tpu_custom_call.1} parent=11 // pred_check_branch
          %278 = sbr.rel (%p276) target = $region28
        $region27: #{tpu_custom_call.1} parent=11 // pred_region
          %s280 = ssub.s32 32, 32
          %281 = vsyncadd [#allocation6], %s280
          %s283 = sshll.u32 [#allocation7], 4
          %s284 = int_to_ptr.vmem [resolvable:$true] %s283
          %286 = dma.hbm_to_vmem [thread:$0]  %s4, 32, %s284, [#allocation6]
        $region28: #{tpu_custom_call.1} parent=11 // pred_fallthru
          _
        // Predicated region
        $region29: #{tpu_custom_call.1} parent=11 // pred_check
          %p287 = pneg %p153
        $region30: #{tpu_custom_call.1} parent=11 // pred_check_branch
          %289 = sbr.rel (%p287) target = $region32
        $region31: #{tpu_custom_call.1} parent=11 // pred_region
          _
        $region32: #{tpu_custom_call.1} parent=11 // pred_fallthru
          _
        // Predicated region
        $region33: #{tpu_custom_call.1} parent=11 // pred_check
          %p290 = pneg %p174
        $region34: #{tpu_custom_call.1} parent=11 // pred_check_branch
          %292 = sbr.rel (%p290) target = $region36
        $region35: #{tpu_custom_call.1} parent=11 // pred_region
          _
        $region36: #{tpu_custom_call.1} parent=11 // pred_fallthru
          _
        // Predicated region
        $region37: #{tpu_custom_call.1} parent=11 // pred_check
          %p293 = pneg %p195
        $region38: #{tpu_custom_call.1} parent=11 // pred_check_branch
          %295 = sbr.rel (%p293) target = $region40
        $region39: #{tpu_custom_call.1} parent=11 // pred_region
          _
        $region40: #{tpu_custom_call.1} parent=11 // pred_fallthru
          _
        // Predicated region
        $region41: #{tpu_custom_call.1} parent=11 // pred_check
          %p296 = pneg %p216
        $region42: #{tpu_custom_call.1} parent=11 // pred_check_branch
          %298 = sbr.rel (%p296) target = $region44
        $region43: #{tpu_custom_call.1} parent=11 // pred_region
          _
        $region44: #{tpu_custom_call.1} parent=11 // pred_fallthru
          _
      $region12: #{tpu_custom_call.1} parent=5 // pred_fallthru
        _
      %p299 = scmp.lt.s32.totalorder %s22, 2
      // Predicated region
      $region45: #{tpu_custom_call.1} parent=5 // pred_check
        %p300 = pneg %p299
      $region46: #{tpu_custom_call.1} parent=5 // pred_check_branch
        %302 = sbr.rel (%p300) target = $region48
      $region47: #{tpu_custom_call.1} parent=5 // pred_region
        // Predicated region
        $region49: #{tpu_custom_call.1} parent=47 // pred_check
          %p303 = pneg %p42
        $region50: #{tpu_custom_call.1} parent=47 // pred_check_branch
          %305 = sbr.rel (%p303) target = $region52
        $region51: #{tpu_custom_call.1} parent=47 // pred_region
          %s306 = sand.u32 %s32, 1
          %s307 = scalar_lea.sflag [#allocation3], %s306
          %s308 = sand.u32 %s32, 1
          %s309 = smul.addr %s308, 8
          %s310 = scalar_lea.vmem [#allocation2], %s309
          %s312 = ssub.s32 128, 128
          %313 = vsyncadd %s307, %s312
          %s314 = smul.addr %s22, 128
          %s315 = scalar_lea.hbm %s0, %s314
          %s317 = sshll.u32 %s310, 4
          %s318 = int_to_ptr.vmem [resolvable:$true] %s317
          %320 = dma.hbm_to_vmem [thread:$0]  %s315, 128, %s318, %s307
        $region52: #{tpu_custom_call.1} parent=47 // pred_fallthru
          _
      $region48: #{tpu_custom_call.1} parent=5 // pred_fallthru
        _
      %p321 = scmp.le.s32.totalorder 1, %s22
      %p322 = scmp.lt.s32.totalorder %s22, 3
      %p323 = pnand %p321, %p322
      %p324 = pneg %p323
      // Predicated region
      $region53: #{tpu_custom_call.1} parent=5 // pred_check
        _
      $region54: #{tpu_custom_call.1} parent=5 // pred_check_branch
        %326 = sbr.rel (%p323) target = $region56
      $region55: #{tpu_custom_call.1} parent=5 // pred_region
        %s327 = ssub.s32 %s22, 1
        %s328 = sand.u32 %s35, 1
        %s329 = scalar_lea.sflag [#allocation3], %s328
        %s330 = sand.u32 %s35, 1
        %s331 = smul.addr %s330, 8
        %s332 = scalar_lea.vmem [#allocation2], %s331
        // Predicated region
        $region57: #{tpu_custom_call.1} parent=55 // pred_check
          %p333 = pneg %p48
        $region58: #{tpu_custom_call.1} parent=55 // pred_check_branch
          %335 = sbr.rel (%p333) target = $region60
        $region59: #{tpu_custom_call.1} parent=55 // pred_region
          %336 = dma.done %s329, 128
        $region60: #{tpu_custom_call.1} parent=55 // pred_fallthru
          _
        // Predicated region
        $region61: #{tpu_custom_call.1} parent=55 // pred_check
          %p337 = pneg %p69
        $region62: #{tpu_custom_call.1} parent=55 // pred_check_branch
          %339 = sbr.rel (%p337) target = $region64
        $region63: #{tpu_custom_call.1} parent=55 // pred_region
          %340 = dma.done [#allocation6], 2048
        $region64: #{tpu_custom_call.1} parent=55 // pred_fallthru
          _
        // Predicated region
        $region65: #{tpu_custom_call.1} parent=55 // pred_check
          %p341 = pneg %p132
        $region66: #{tpu_custom_call.1} parent=55 // pred_check_branch
          %343 = sbr.rel (%p341) target = $region68
        $region67: #{tpu_custom_call.1} parent=55 // pred_region
          %344 = dma.done [#allocation6], 32
        $region68: #{tpu_custom_call.1} parent=55 // pred_fallthru
          _
        %s345 = sand.u32 %s35, 1
        %s346 = scalar_lea.sflag [#allocation3], %s345
        %s347 = sand.u32 %s35, 1
        %s348 = smul.addr %s347, 8
        %s349 = scalar_lea.vmem [#allocation2], %s348
        %p350 = pneg %p48
        %p351 = pneg %p45
        %p352 = pneg %p69
        %p353 = pneg %p66
        %p354 = pneg %p90
        %p355 = pneg %p87
        %p356 = pneg %p111
        %p357 = pneg %p108
        %p358 = pneg %p132
        %p359 = pneg %p129
        %p360 = pneg %p153
        %p361 = pneg %p150
        %p362 = pneg %p174
        %p363 = pneg %p171
        %p364 = pneg %p195
        %p365 = pneg %p192
        %p366 = pneg %p216
        %p367 = pneg %p213
        %p368 = pneg %p242
        %p369 = pneg %p239
        %s370 = sand.u32 %s229, 1
        %s371 = scalar_lea.sflag [#allocation4], %s370
        %s372 = sand.u32 %s229, 1
        %s373 = smul.addr %s372, 8
        %s374 = scalar_lea.vmem [#allocation8], %s373
        %v376 = vld [vmem:[%s332] sm:$0xff]
        %v377 = vld [vmem:[#allocation5] sm:$0xff]
        %v378 = vld [vmem:[#allocation5 + $0x8] sm:$0xff]
        %v379 = vld [vmem:[#allocation5 + $0x10] sm:$0xff]
        %v380 = vld [vmem:[#allocation5 + $0x18] sm:$0xff]
        %v381 = vld [vmem:[#allocation5 + $0x20] sm:$0xff]
        %v382 = vld [vmem:[#allocation5 + $0x28] sm:$0xff]
        %v383 = vld [vmem:[#allocation5 + $0x30] sm:$0xff]
        %v384 = vld [vmem:[#allocation5 + $0x38] sm:$0xff]
        %v385 = vld [vmem:[#allocation5 + $0x40] sm:$0xff]
        %v386 = vld [vmem:[#allocation5 + $0x48] sm:$0xff]
        %v387 = vld [vmem:[#allocation5 + $0x50] sm:$0xff]
        %v388 = vld [vmem:[#allocation5 + $0x58] sm:$0xff]
        %v389 = vld [vmem:[#allocation5 + $0x60] sm:$0xff]
        %v390 = vld [vmem:[#allocation5 + $0x68] sm:$0xff]
        %v391 = vld [vmem:[#allocation5 + $0x70] sm:$0xff]
        %v392 = vld [vmem:[#allocation5 + $0x78] sm:$0xff]
        %vm393 = vcmask 523264
        %v395 = vsel %vm393, %v376, 0
        %397 = vmatprep.subr.mxu0 %v378
        %398 = vmatpush1.msra.mxu0 %v377
        %399 = vmatprep.subr.mxu0 %v380
        %400 = vmatpush1.msra.mxu0 %v379
        %401 = vmatprep.subr.mxu0 %v382
        %402 = vmatpush1.msra.mxu0 %v381
        %403 = vmatprep.subr.mxu0 %v384
        %404 = vmatpush1.msra.mxu0 %v383
        %405 = vmatprep.subr.mxu0 %v386
        %406 = vmatpush1.msra.mxu0 %v385
        %407 = vmatprep.subr.mxu0 %v388
        %408 = vmatpush1.msra.mxu0 %v387
        %409 = vmatprep.subr.mxu0 %v390
        %410 = vmatpush1.msra.mxu0 %v389
        %411 = vmatprep.subr.mxu0 %v392
        %412 = vmatpush1.msra.mxu0 %v391
        %413 = vmatprep.subr.mxu0 0.0
        %414 = vmatpush1.msra.mxu0 0.0
        %415 = vmatprep.subr.mxu0 0.0
        %416 = vmatpush1.msra.mxu0 0.0
        %417 = vmatprep.subr.mxu0 0.0
        %418 = vmatpush1.msra.mxu0 0.0
        %419 = vmatprep.subr.mxu0 0.0
        %420 = vmatpush1.msra.mxu0 0.0
        %421 = vmatprep.subr.mxu0 0.0
        %422 = vmatpush1.msra.mxu0 0.0
        %423 = vmatprep.subr.mxu0 0.0
        %424 = vmatpush1.msra.mxu0 0.0
        %425 = vmatprep.subr.mxu0 0.0
        %426 = vmatpush1.msra.mxu0 0.0
        %427 = vmatprep.subr.mxu0 0.0
        %428 = vmatpush1.msra.mxu0 0.0
        %429 = vmatprep.subr.mxu0 0.0
        %430 = vmatpush1.msra.mxu0 0.0
        %431 = vmatprep.subr.mxu0 0.0
        %432 = vmatpush1.msra.mxu0 0.0
        %433 = vmatprep.subr.mxu0 0.0
        %434 = vmatpush1.msra.mxu0 0.0
        %435 = vmatprep.subr.mxu0 0.0
        %436 = vmatpush1.msra.mxu0 0.0
        %437 = vmatprep.subr.mxu0 0.0
        %438 = vmatpush1.msra.mxu0 0.0
        %439 = vmatprep.subr.mxu0 0.0
        %440 = vmatpush1.msra.mxu0 0.0
        %441 = vmatprep.subr.mxu0 0.0
        %442 = vmatpush1.msra.mxu0 0.0
        %443 = vmatprep.subr.mxu0 0.0
        %444 = vmatpush1.msra.mxu0 0.0
        %445 = vmatprep.subr.mxu0 0.0
        %446 = vmatpush1.msra.mxu0 0.0
        %447 = vmatprep.subr.mxu0 0.0
        %448 = vmatpush1.msra.mxu0 0.0
        %449 = vmatprep.subr.mxu0 0.0
        %450 = vmatpush1.msra.mxu0 0.0
        %451 = vmatprep.subr.mxu0 0.0
        %452 = vmatpush1.msra.mxu0 0.0
        %453 = vmatprep.subr.mxu0 0.0
        %454 = vmatpush1.msra.mxu0 0.0
        %455 = vmatprep.subr.mxu0 0.0
        %456 = vmatpush1.msra.mxu0 0.0
        %457 = vmatprep.subr.mxu0 0.0
        %458 = vmatpush1.msra.mxu0 0.0
        %459 = vmatprep.subr.mxu0 0.0
        %460 = vmatpush1.msra.mxu0 0.0
        %461 = vmatprep.mubr.f32.mxu0 0.0
        %462 = vmatmul.mubr.f32.gmra.mrb[0].mxu0 %v395
        %v463 = vpop.f32.mrb[0].mxu0
        %v464 = vadd.f32 0.0, %v463
        %v465 = vpop.f32.mrb[0].mxu0
        %v466 = vadd.f32 0.0, %v465
        %467 = vdwg.mxu0
        %v468 = vld [vmem:[%s7] sm:$0xff]
        %v469 = vld [vmem:[%s8] sm:$0xff]
        %v470 = vadd.f32 %v464, %v466
        %471 = vadd.xlane.f32.xlu0 %v470
        %v472 = vpop.xlane.xlu0 %471
        %vm473 = vcmask 64512
        %v475 = vsel %vm473, %v468, 0
        %477 = vmatprep.subr.mxu0 0.0
        %478 = vmatpush1.msra.mxu0 %v472
        %479 = vmatprep.subr.mxu0 0.0
        %480 = vmatpush1.msra.mxu0 0.0
        %481 = vmatprep.subr.mxu0 0.0
        %482 = vmatpush1.msra.mxu0 0.0
        %483 = vmatprep.subr.mxu0 0.0
        %484 = vmatpush1.msra.mxu0 0.0
        %485 = vmatprep.subr.mxu0 0.0
        %486 = vmatpush1.msra.mxu0 0.0
        %487 = vmatprep.subr.mxu0 0.0
        %488 = vmatpush1.msra.mxu0 0.0
        %489 = vmatprep.subr.mxu0 0.0
        %490 = vmatpush1.msra.mxu0 0.0
        %491 = vmatprep.subr.mxu0 0.0
        %492 = vmatpush1.msra.mxu0 0.0
        %493 = vmatprep.subr.mxu0 0.0
        %494 = vmatpush1.msra.mxu0 0.0
        %495 = vmatprep.subr.mxu0 0.0
        %496 = vmatpush1.msra.mxu0 0.0
        %497 = vmatprep.subr.mxu0 0.0
        %498 = vmatpush1.msra.mxu0 0.0
        %499 = vmatprep.subr.mxu0 0.0
        %500 = vmatpush1.msra.mxu0 0.0
        %501 = vmatprep.subr.mxu0 0.0
        %502 = vmatpush1.msra.mxu0 0.0
        %503 = vmatprep.subr.mxu0 0.0
        %504 = vmatpush1.msra.mxu0 0.0
        %505 = vmatprep.subr.mxu0 0.0
        %506 = vmatpush1.msra.mxu0 0.0
        %507 = vmatprep.subr.mxu0 0.0
        %508 = vmatpush1.msra.mxu0 0.0
        %509 = vmatprep.subr.mxu0 0.0
        %510 = vmatpush1.msra.mxu0 0.0
        %511 = vmatprep.subr.mxu0 0.0
        %512 = vmatpush1.msra.mxu0 0.0
        %513 = vmatprep.subr.mxu0 0.0
        %514 = vmatpush1.msra.mxu0 0.0
        %515 = vmatprep.subr.mxu0 0.0
        %516 = vmatpush1.msra.mxu0 0.0
        %517 = vmatprep.subr.mxu0 0.0
        %518 = vmatpush1.msra.mxu0 0.0
        %519 = vmatprep.subr.mxu0 0.0
        %520 = vmatpush1.msra.mxu0 0.0
        %521 = vmatprep.subr.mxu0 0.0
        %522 = vmatpush1.msra.mxu0 0.0
        %523 = vmatprep.subr.mxu0 0.0
        %524 = vmatpush1.msra.mxu0 0.0
        %525 = vmatprep.subr.mxu0 0.0
        %526 = vmatpush1.msra.mxu0 0.0
        %527 = vmatprep.subr.mxu0 0.0
        %528 = vmatpush1.msra.mxu0 0.0
        %529 = vmatprep.subr.mxu0 0.0
        %530 = vmatpush1.msra.mxu0 0.0
        %531 = vmatprep.subr.mxu0 0.0
        %532 = vmatpush1.msra.mxu0 0.0
        %533 = vmatprep.subr.mxu0 0.0
        %534 = vmatpush1.msra.mxu0 0.0
        %535 = vmatprep.subr.mxu0 0.0
        %536 = vmatpush1.msra.mxu0 0.0
        %537 = vmatprep.subr.mxu0 0.0
        %538 = vmatpush1.msra.mxu0 0.0
        %539 = vmatprep.subr.mxu0 0.0
        %540 = vmatpush1.msra.mxu0 0.0
        %541 = vmatprep.mubr.f32.mxu0 0.0
        %542 = vmatmul.mubr.f32.gmra.mrb[0].mxu0 %v475
        %v543 = vpop.f32.mrb[0].mxu0
        %v544 = vadd.f32 0.0, %v543
        %v545 = vpop.f32.mrb[0].mxu0
        %546 = vdwg.mxu0
        %v547 = vmul.f32 %v544, 0.00390625
        %v549 = vsel %vm473, %v469, 0
        %551 = vmatprep.subr.mxu0 0.0
        %552 = vmatpush1.msra.mxu0 %v547
        %553 = vmatprep.subr.mxu0 0.0
        %554 = vmatpush1.msra.mxu0 0.0
        %555 = vmatprep.subr.mxu0 0.0
        %556 = vmatpush1.msra.mxu0 0.0
        %557 = vmatprep.subr.mxu0 0.0
        %558 = vmatpush1.msra.mxu0 0.0
        %559 = vmatprep.subr.mxu0 0.0
        %560 = vmatpush1.msra.mxu0 0.0
        %561 = vmatprep.subr.mxu0 0.0
        %562 = vmatpush1.msra.mxu0 0.0
        %563 = vmatprep.subr.mxu0 0.0
        %564 = vmatpush1.msra.mxu0 0.0
        %565 = vmatprep.subr.mxu0 0.0
        %566 = vmatpush1.msra.mxu0 0.0
        %567 = vmatprep.subr.mxu0 0.0
        %568 = vmatpush1.msra.mxu0 0.0
        %569 = vmatprep.subr.mxu0 0.0
        %570 = vmatpush1.msra.mxu0 0.0
        %571 = vmatprep.subr.mxu0 0.0
        %572 = vmatpush1.msra.mxu0 0.0
        %573 = vmatprep.subr.mxu0 0.0
        %574 = vmatpush1.msra.mxu0 0.0
        %575 = vmatprep.subr.mxu0 0.0
        %576 = vmatpush1.msra.mxu0 0.0
        %577 = vmatprep.subr.mxu0 0.0
        %578 = vmatpush1.msra.mxu0 0.0
        %579 = vmatprep.subr.mxu0 0.0
        %580 = vmatpush1.msra.mxu0 0.0
        %581 = vmatprep.subr.mxu0 0.0
        %582 = vmatpush1.msra.mxu0 0.0
        %583 = vmatprep.subr.mxu0 0.0
        %584 = vmatpush1.msra.mxu0 0.0
        %585 = vmatprep.subr.mxu0 0.0
        %586 = vmatpush1.msra.mxu0 0.0
        %587 = vmatprep.subr.mxu0 0.0
        %588 = vmatpush1.msra.mxu0 0.0
        %589 = vmatprep.subr.mxu0 0.0
        %590 = vmatpush1.msra.mxu0 0.0
        %591 = vmatprep.subr.mxu0 0.0
        %592 = vmatpush1.msra.mxu0 0.0
        %593 = vmatprep.subr.mxu0 0.0
        %594 = vmatpush1.msra.mxu0 0.0
        %595 = vmatprep.subr.mxu0 0.0
        %596 = vmatpush1.msra.mxu0 0.0
        %597 = vmatprep.subr.mxu0 0.0
        %598 = vmatpush1.msra.mxu0 0.0
        %599 = vmatprep.subr.mxu0 0.0
        %600 = vmatpush1.msra.mxu0 0.0
        %601 = vmatprep.subr.mxu0 0.0
        %602 = vmatpush1.msra.mxu0 0.0
        %603 = vmatprep.subr.mxu0 0.0
        %604 = vmatpush1.msra.mxu0 0.0
        %605 = vmatprep.subr.mxu0 0.0
        %606 = vmatpush1.msra.mxu0 0.0
        %607 = vmatprep.subr.mxu0 0.0
        %608 = vmatpush1.msra.mxu0 0.0
        %609 = vmatprep.subr.mxu0 0.0
        %610 = vmatpush1.msra.mxu0 0.0
        %611 = vmatprep.subr.mxu0 0.0
        %612 = vmatpush1.msra.mxu0 0.0
        %613 = vmatprep.subr.mxu0 0.0
        %614 = vmatpush1.msra.mxu0 0.0
        %615 = vmatprep.mubr.f32.mxu0 0.0
        %616 = vmatmul.mubr.f32.gmra.mrb[0].mxu0 %v549
        %v617 = vpop.f32.mrb[0].mxu0
        %v618 = vadd.f32 0.0, %v617
        %v619 = vpop.f32.mrb[0].mxu0
        %620 = vdwg.mxu0
        %622 = vset.pattern.permute.xlu0 0
        %623 = vperm.xlu0 %622, %v618
        %v624 = vpop.permute.xlu0 %623
        %v626 = vsub.f32 %v464, %v624
        %v627 = vsub.f32 %v466, %v624
        %v628 = vmul.f32 %v626, %v626
        %v629 = vmul.f32 %v627, %v627
        %v630 = vadd.f32 %v628, %v629
        %631 = vadd.xlane.f32.xlu0 %v630
        %v632 = vpop.xlane.xlu0 %631
        %633 = vmatprep.subr.mxu0 0.0
        %634 = vmatpush1.msra.mxu0 %v632
        %635 = vmatprep.subr.mxu0 0.0
        %636 = vmatpush1.msra.mxu0 0.0
        %637 = vmatprep.subr.mxu0 0.0
        %638 = vmatpush1.msra.mxu0 0.0
        %639 = vmatprep.subr.mxu0 0.0
        %640 = vmatpush1.msra.mxu0 0.0
        %641 = vmatprep.subr.mxu0 0.0
        %642 = vmatpush1.msra.mxu0 0.0
        %643 = vmatprep.subr.mxu0 0.0
        %644 = vmatpush1.msra.mxu0 0.0
        %645 = vmatprep.subr.mxu0 0.0
        %646 = vmatpush1.msra.mxu0 0.0
        %647 = vmatprep.subr.mxu0 0.0
        %648 = vmatpush1.msra.mxu0 0.0
        %649 = vmatprep.subr.mxu0 0.0
        %650 = vmatpush1.msra.mxu0 0.0
        %651 = vmatprep.subr.mxu0 0.0
        %652 = vmatpush1.msra.mxu0 0.0
        %653 = vmatprep.subr.mxu0 0.0
        %654 = vmatpush1.msra.mxu0 0.0
        %655 = vmatprep.subr.mxu0 0.0
        %656 = vmatpush1.msra.mxu0 0.0
        %657 = vmatprep.subr.mxu0 0.0
        %658 = vmatpush1.msra.mxu0 0.0
        %659 = vmatprep.subr.mxu0 0.0
        %660 = vmatpush1.msra.mxu0 0.0
        %661 = vmatprep.subr.mxu0 0.0
        %662 = vmatpush1.msra.mxu0 0.0
        %663 = vmatprep.subr.mxu0 0.0
        %664 = vmatpush1.msra.mxu0 0.0
        %665 = vmatprep.subr.mxu0 0.0
        %666 = vmatpush1.msra.mxu0 0.0
        %667 = vmatprep.subr.mxu0 0.0
        %668 = vmatpush1.msra.mxu0 0.0
        %669 = vmatprep.subr.mxu0 0.0
        %670 = vmatpush1.msra.mxu0 0.0
        %671 = vmatprep.subr.mxu0 0.0
        %672 = vmatpush1.msra.mxu0 0.0
        %673 = vmatprep.subr.mxu0 0.0
        %674 = vmatpush1.msra.mxu0 0.0
        %675 = vmatprep.subr.mxu0 0.0
        %676 = vmatpush1.msra.mxu0 0.0
        %677 = vmatprep.subr.mxu0 0.0
        %678 = vmatpush1.msra.mxu0 0.0
        %679 = vmatprep.subr.mxu0 0.0
        %680 = vmatpush1.msra.mxu0 0.0
        %681 = vmatprep.subr.mxu0 0.0
        %682 = vmatpush1.msra.mxu0 0.0
        %683 = vmatprep.subr.mxu0 0.0
        %684 = vmatpush1.msra.mxu0 0.0
        %685 = vmatprep.subr.mxu0 0.0
        %686 = vmatpush1.msra.mxu0 0.0
        %687 = vmatprep.subr.mxu0 0.0
        %688 = vmatpush1.msra.mxu0 0.0
        %689 = vmatprep.subr.mxu0 0.0
        %690 = vmatpush1.msra.mxu0 0.0
        %691 = vmatprep.subr.mxu0 0.0
        %692 = vmatpush1.msra.mxu0 0.0
        %693 = vmatprep.subr.mxu0 0.0
        %694 = vmatpush1.msra.mxu0 0.0
        %695 = vmatprep.subr.mxu0 0.0
        %696 = vmatpush1.msra.mxu0 0.0
        %697 = vmatprep.mubr.f32.mxu0 0.0
        %698 = vmatmul.mubr.f32.gmra.mrb[0].mxu0 %v475
        %v699 = vpop.f32.mrb[0].mxu0
        %v700 = vadd.f32 0.0, %v699
        %v701 = vpop.f32.mrb[0].mxu0
        %702 = vdwg.mxu0
        %v703 = vmul.f32 %v700, 0.00390625
        %v704 = vadd.f32 %v703, 1e-05
        %v705 = vrsqrt.pop %v704
        %706 = vmatprep.subr.mxu0 0.0
        %707 = vmatpush1.msra.mxu0 %v705
        %708 = vmatprep.subr.mxu0 0.0
        %709 = vmatpush1.msra.mxu0 0.0
        %710 = vmatprep.subr.mxu0 0.0
        %711 = vmatpush1.msra.mxu0 0.0
        %712 = vmatprep.subr.mxu0 0.0
        %713 = vmatpush1.msra.mxu0 0.0
        %714 = vmatprep.subr.mxu0 0.0
        %715 = vmatpush1.msra.mxu0 0.0
        %716 = vmatprep.subr.mxu0 0.0
        %717 = vmatpush1.msra.mxu0 0.0
        %718 = vmatprep.subr.mxu0 0.0
        %719 = vmatpush1.msra.mxu0 0.0
        %720 = vmatprep.subr.mxu0 0.0
        %721 = vmatpush1.msra.mxu0 0.0
        %722 = vmatprep.subr.mxu0 0.0
        %723 = vmatpush1.msra.mxu0 0.0
        %724 = vmatprep.subr.mxu0 0.0
        %725 = vmatpush1.msra.mxu0 0.0
        %726 = vmatprep.subr.mxu0 0.0
        %727 = vmatpush1.msra.mxu0 0.0
        %728 = vmatprep.subr.mxu0 0.0
        %729 = vmatpush1.msra.mxu0 0.0
        %730 = vmatprep.subr.mxu0 0.0
        %731 = vmatpush1.msra.mxu0 0.0
        %732 = vmatprep.subr.mxu0 0.0
        %733 = vmatpush1.msra.mxu0 0.0
        %734 = vmatprep.subr.mxu0 0.0
        %735 = vmatpush1.msra.mxu0 0.0
        %736 = vmatprep.subr.mxu0 0.0
        %737 = vmatpush1.msra.mxu0 0.0
        %738 = vmatprep.subr.mxu0 0.0
        %739 = vmatpush1.msra.mxu0 0.0
        %740 = vmatprep.subr.mxu0 0.0
        %741 = vmatpush1.msra.mxu0 0.0
        %742 = vmatprep.subr.mxu0 0.0
        %743 = vmatpush1.msra.mxu0 0.0
        %744 = vmatprep.subr.mxu0 0.0
        %745 = vmatpush1.msra.mxu0 0.0
        %746 = vmatprep.subr.mxu0 0.0
        %747 = vmatpush1.msra.mxu0 0.0
        %748 = vmatprep.subr.mxu0 0.0
        %749 = vmatpush1.msra.mxu0 0.0
        %750 = vmatprep.subr.mxu0 0.0
        %751 = vmatpush1.msra.mxu0 0.0
        %752 = vmatprep.subr.mxu0 0.0
        %753 = vmatpush1.msra.mxu0 0.0
        %754 = vmatprep.subr.mxu0 0.0
        %755 = vmatpush1.msra.mxu0 0.0
        %756 = vmatprep.subr.mxu0 0.0
        %757 = vmatpush1.msra.mxu0 0.0
        %758 = vmatprep.subr.mxu0 0.0
        %759 = vmatpush1.msra.mxu0 0.0
        %760 = vmatprep.subr.mxu0 0.0
        %761 = vmatpush1.msra.mxu0 0.0
        %762 = vmatprep.subr.mxu0 0.0
        %763 = vmatpush1.msra.mxu0 0.0
        %764 = vmatprep.subr.mxu0 0.0
        %765 = vmatpush1.msra.mxu0 0.0
        %766 = vmatprep.subr.mxu0 0.0
        %767 = vmatpush1.msra.mxu0 0.0
        %768 = vmatprep.subr.mxu0 0.0
        %769 = vmatpush1.msra.mxu0 0.0
        %770 = vmatprep.mubr.f32.mxu0 0.0
        %771 = vmatmul.mubr.f32.gmra.mrb[0].mxu0 %v549
        %v772 = vpop.f32.mrb[0].mxu0
        %v773 = vadd.f32 0.0, %v772
        %v774 = vpop.f32.mrb[0].mxu0
        %775 = vdwg.mxu0
        %v776 = vld [vmem:[%s2] sm:$0xff]
        %v777 = vmul.f32 %v773, %v776
        %779 = vset.pattern.permute.xlu0 0
        %780 = vperm.xlu0 %779, %v777
        %v781 = vpop.permute.xlu0 %780
        %v783 = vmul.f32 %v626, %v781
        %v784 = vmul.f32 %v627, %v781
        %v785 = vld [vmem:[%s3] sm:$0xff]
        %787 = vset.pattern.permute.xlu0 0
        %788 = vperm.xlu0 %787, %v785
        %v789 = vpop.permute.xlu0 %788
        %v791 = vadd.f32 %v783, %v789
        %v792 = vadd.f32 %v784, %v789
        %v793 = vsub.f32 0.0, %v791
        %v794 = vsub.f32 0.0, %v792
        %v795 = vmul.f32 %v793, 1.442695
        %v796 = vpow.pop %v795
        %v797 = vmul.f32 %v794, 1.442695
        %v798 = vpow.pop %v797
        %v799 = vadd.f32 %v796, 1.0
        %v800 = vadd.f32 %v798, 1.0
        %v801 = vrcp.pop %v799
        %v802 = vrcp.pop %v800
        %v803 = vmul.f32 %v791, %v801
        %v804 = vmul.f32 %v792, %v802
        %v805 = vld [vmem:[%s6] sm:$0xff]
        %v806 = vld [vmem:[%s6 + $0x8] sm:$0xff]
        %v807 = vld [vmem:[%s6 + $0x10] sm:$0x1]
        %v808 = vld [vmem:[%s6 + $0x18] sm:$0x1]
        %809 = vrot.lane.b32.xlu0 %v803, 17
        %v810 = vpop.permute.xlu0 %809
        %811 = vrot.lane.b32.xlu0 %v804, 17
        %v812 = vpop.permute.xlu0 %811
        %v813 = vlaneseq
        %v814 = vand.u32 %v813, 127
        %vm815 = vcmp.lt.s32.totalorder %v814, 17
        %v816 = vsel %vm815, %v810, %v812
        %v817 = vsel %vm815, %v812, %v810
        %v818 = vlaneseq
        %v819 = vshrl.u32 %v818, 7
        %v820 = vsub.s32 0, %v819
        %v821 = vrot.slane %v805, %v820
        %v822 = vlaneseq
        %v823 = vshrl.u32 %v822, 7
        %v824 = vsub.s32 0, %v823
        %v825 = vrot.slane %v806, %v824
        %v826 = vmul.f32 %v817, %v821
        %v827 = vmul.f32 %v816, %v825
        %828 = vrot.lane.b32.xlu0 %v803, 16
        %v829 = vpop.permute.xlu0 %828
        %830 = vrot.lane.b32.xlu0 %v804, 16
        %v831 = vpop.permute.xlu0 %830
        %vm832 = vcmp.lt.s32.totalorder %v814, 16
        %v833 = vsel %vm832, %v829, %v831
        %v834 = vsel %vm832, %v831, %v829
        %v835 = vlaneseq
        %v836 = vshrl.u32 %v835, 7
        %v837 = vsub.s32 1, %v836
        %v838 = vrot.slane %v805, %v837
        %v839 = vlaneseq
        %v840 = vshrl.u32 %v839, 7
        %v841 = vsub.s32 1, %v840
        %v842 = vrot.slane %v806, %v841
        %v843 = vmul.f32 %v834, %v838
        %v844 = vmul.f32 %v833, %v842
        %845 = vrot.lane.b32.xlu0 %v803, 15
        %v846 = vpop.permute.xlu0 %845
        %847 = vrot.lane.b32.xlu0 %v804, 15
        %v848 = vpop.permute.xlu0 %847
        %vm849 = vcmp.lt.s32.totalorder %v814, 15
        %v850 = vsel %vm849, %v846, %v848
        %v851 = vsel %vm849, %v848, %v846
        %v852 = vlaneseq
        %v853 = vshrl.u32 %v852, 7
        %v854 = vsub.s32 2, %v853
        %v855 = vrot.slane %v805, %v854
        %v856 = vlaneseq
        %v857 = vshrl.u32 %v856, 7
        %v858 = vsub.s32 2, %v857
        %v859 = vrot.slane %v806, %v858
        %v860 = vmul.f32 %v851, %v855
        %v861 = vmul.f32 %v850, %v859
        %862 = vrot.lane.b32.xlu0 %v803, 1
        %v863 = vpop.permute.xlu0 %862
        %864 = vrot.lane.b32.xlu0 %v804, 1
        %v865 = vpop.permute.xlu0 %864
        %vm866 = vcmp.lt.s32.totalorder %v814, 1
        %v867 = vsel %vm866, %v863, %v865
        %v868 = vsel %vm866, %v865, %v863
        %v869 = vlaneseq
        %v870 = vshrl.u32 %v869, 7
        %v871 = vsub.s32 3, %v870
        %v872 = vrot.slane %v805, %v871
        %v873 = vlaneseq
        %v874 = vshrl.u32 %v873, 7
        %v875 = vsub.s32 3, %v874
        %v876 = vrot.slane %v806, %v875
        %v877 = vmul.f32 %v868, %v872
        %v878 = vmul.f32 %v867, %v876
        %879 = vrot.lane.b32.xlu0 %v803, 127
        %v880 = vpop.permute.xlu0 %879
        %881 = vrot.lane.b32.xlu0 %v804, 127
        %v882 = vpop.permute.xlu0 %881
        %vm883 = vcmp.lt.s32.totalorder %v814, 127
        %v884 = vsel %vm883, %v880, %v882
        %v885 = vsel %vm883, %v882, %v880
        %v886 = vlaneseq
        %v887 = vshrl.u32 %v886, 7
        %v888 = vsub.s32 5, %v887
        %v889 = vrot.slane %v805, %v888
        %v890 = vlaneseq
        %v891 = vshrl.u32 %v890, 7
        %v892 = vsub.s32 5, %v891
        %v893 = vrot.slane %v806, %v892
        %v894 = vmul.f32 %v884, %v889
        %v895 = vmul.f32 %v885, %v893
        %896 = vrot.lane.b32.xlu0 %v803, 113
        %v897 = vpop.permute.xlu0 %896
        %898 = vrot.lane.b32.xlu0 %v804, 113
        %v899 = vpop.permute.xlu0 %898
        %vm900 = vcmp.lt.s32.totalorder %v814, 113
        %v901 = vsel %vm900, %v897, %v899
        %v902 = vsel %vm900, %v899, %v897
        %v903 = vlaneseq
        %v904 = vshrl.u32 %v903, 7
        %v905 = vsub.s32 6, %v904
        %v906 = vrot.slane %v805, %v905
        %v907 = vlaneseq
        %v908 = vshrl.u32 %v907, 7
        %v909 = vsub.s32 6, %v908
        %v910 = vrot.slane %v806, %v909
        %v911 = vmul.f32 %v901, %v906
        %v912 = vmul.f32 %v902, %v910
        %913 = vrot.lane.b32.xlu0 %v803, 112
        %v914 = vpop.permute.xlu0 %913
        %915 = vrot.lane.b32.xlu0 %v804, 112
        %v916 = vpop.permute.xlu0 %915
        %vm917 = vcmp.lt.s32.totalorder %v814, 112
        %v918 = vsel %vm917, %v914, %v916
        %v919 = vsel %vm917, %v916, %v914
        %v920 = vlaneseq
        %v921 = vshrl.u32 %v920, 7
        %v922 = vsub.s32 7, %v921
        %v923 = vrot.slane %v805, %v922
        %v924 = vlaneseq
        %v925 = vshrl.u32 %v924, 7
        %v926 = vsub.s32 7, %v925
        %v927 = vrot.slane %v806, %v926
        %v928 = vmul.f32 %v918, %v923
        %v929 = vmul.f32 %v919, %v927
        %930 = vrot.lane.b32.xlu0 %v803, 111
        %v931 = vpop.permute.xlu0 %930
        %932 = vrot.lane.b32.xlu0 %v804, 111
        %v933 = vpop.permute.xlu0 %932
        %vm934 = vcmp.lt.s32.totalorder %v814, 111
        %v935 = vsel %vm934, %v931, %v933
        %v936 = vsel %vm934, %v933, %v931
        %v937 = vlaneseq
        %v938 = vshrl.u32 %v937, 7
        %v939 = vsub.s32 0, %v938
        %v940 = vrot.slane %v807, %v939
        %v941 = vlaneseq
        %v942 = vshrl.u32 %v941, 7
        %v943 = vsub.s32 0, %v942
        %v944 = vrot.slane %v808, %v943
        %v945 = vmul.f32 %v935, %v940
        %v946 = vmul.f32 %v936, %v944
        %v947 = vld [vmem:[#allocation7] sm:$0x3]
        %v948 = vpack.c.bf16 %v843, %v826
        %v949 = vpack.c.bf16 %v844, %v827
        %v950 = vpack.c.bf16 %v877, %v860
        %v951 = vpack.c.bf16 %v878, %v861
        %v952 = vpack.c.bf16 %v894, %v803
        %v953 = vpack.c.bf16 %v895, %v804
        %v954 = vpack.c.bf16 %v928, %v911
        %v955 = vpack.c.bf16 %v929, %v912
        %v956 = vpack.c.bf16 %v945, %v945
        %v957 = vpack.c.bf16 %v946, %v946
        %v958 = vld [vmem:[%s5] sm:$0xf]
        %960 = vset.pattern.permute.xlu0 0
        %961 = vperm.xlu0 %960, %v958
        %v962 = vpop.permute.xlu0 %961
        %vm964 = vcmask 588800
        %v966 = vsel %vm964, %v947, 0
        %vm968 = vcmask 1043456
        %v970 = vsel %vm968, %v956, 0
        %v973 = vsel %vm968, %v957, 0
        %975 = vmatprep.subr.bf16.mxu0 %v949
        %976 = vmatpush1.bf16.msra.mxu0 %v948
        %977 = vmatprep.subr.bf16.mxu0 %v951
        %978 = vmatpush1.bf16.msra.mxu0 %v950
        %979 = vmatprep.subr.bf16.mxu0 %v953
        %980 = vmatpush1.bf16.msra.mxu0 %v952
        %981 = vmatprep.subr.bf16.mxu0 %v955
        %982 = vmatpush1.bf16.msra.mxu0 %v954
        %983 = vmatprep.subr.bf16.mxu0 %v973
        %984 = vmatpush1.bf16.msra.mxu0 %v970
        %985 = vmatprep.subr.bf16.mxu0 0
        %986 = vmatpush1.bf16.msra.mxu0 0
        %987 = vmatprep.subr.bf16.mxu0 0
        %988 = vmatpush1.bf16.msra.mxu0 0
        %989 = vmatprep.subr.bf16.mxu0 0
        %990 = vmatpush1.bf16.msra.mxu0 0
        %991 = vmatprep.subr.bf16.mxu0 0
        %992 = vmatpush1.bf16.msra.mxu0 0
        %993 = vmatprep.subr.bf16.mxu0 0
        %994 = vmatpush1.bf16.msra.mxu0 0
        %995 = vmatprep.subr.bf16.mxu0 0
        %996 = vmatpush1.bf16.msra.mxu0 0
        %997 = vmatprep.subr.bf16.mxu0 0
        %998 = vmatpush1.bf16.msra.mxu0 0
        %999 = vmatprep.subr.bf16.mxu0 0
        %1000 = vmatpush1.bf16.msra.mxu0 0
        %1001 = vmatprep.subr.bf16.mxu0 0
        %1002 = vmatpush1.bf16.msra.mxu0 0
        %1003 = vmatprep.subr.bf16.mxu0 0
        %1004 = vmatpush1.bf16.msra.mxu0 0
        %1005 = vmatprep.subr.bf16.mxu0 0
        %1006 = vmatpush1.bf16.msra.mxu0 0
        %1007 = vmatprep.mubr.bf16.mxu0 0
        %1008 = vmatmul.mubr.bf16.gmra.mrb[0].mxu0 %v966
        %v1009 = vpop.f32.mrb[0].mxu0
        %v1010 = vadd.f32 %v962, %v1009
        %v1011 = vpop.f32.mrb[0].mxu0
        %v1012 = vadd.f32 %v962, %v1011
        %v1013 = vpop.f32.mrb[0].mxu0
        %v1014 = vpop.f32.mrb[0].mxu0
        %1015 = vdwg.mxu0
        %v1018 = vcombine.low %v1010, %v1012
        %1020 = vst [vmem:[%s374] sm:$0xff] %v1018
        %s1021 = sand.u32 %s229, 1
        %s1022 = scalar_lea.sflag [#allocation4], %s1021
        %s1023 = sand.u32 %s229, 1
        %s1024 = smul.addr %s1023, 8
        %s1025 = scalar_lea.vmem [#allocation8], %s1024
        // Predicated region
        $region69: #{tpu_custom_call.1} parent=55 // pred_check
          %p1026 = pneg %p239
        $region70: #{tpu_custom_call.1} parent=55 // pred_check_branch
          %1028 = sbr.rel (%p1026) target = $region72
        $region71: #{tpu_custom_call.1} parent=55 // pred_region
          %s1030 = ssub.s32 128, 128
          %1031 = vsyncadd %s1022, %s1030
          %s1032 = smul.addr %s27, 2
          %s1033 = smul.addr %s1032, 64
          %s1034 = scalar_lea.hbm %s9, %s1033
          %s1036 = sshll.u32 %s1025, 4
          %s1037 = int_to_ptr.vmem [resolvable:$true] %s1036
          %1039 = dma.vmem_to_hbm [thread:$0]  %s1037, 128, %s1034, %s1022
        $region72: #{tpu_custom_call.1} parent=55 // pred_fallthru
          _
      $region56: #{tpu_custom_call.1} parent=5 // pred_fallthru
        _
      %p1040 = scmp.le.s32.totalorder 2, %s22
      // Predicated region
      $region73: #{tpu_custom_call.1} parent=5 // pred_check
        %p1041 = pneg %p1040
      $region74: #{tpu_custom_call.1} parent=5 // pred_check_branch
        %1043 = sbr.rel (%p1041) target = $region76
      $region75: #{tpu_custom_call.1} parent=5 // pred_region
        %s1044 = ssub.s32 %s22, 2
        // Predicated region
        $region77: #{tpu_custom_call.1} parent=75 // pred_check
          %p1045 = pneg %p245
        $region78: #{tpu_custom_call.1} parent=75 // pred_check_branch
          %1047 = sbr.rel (%p1045) target = $region80
        $region79: #{tpu_custom_call.1} parent=75 // pred_region
          %s1048 = sand.u32 %s230, 1
          %s1049 = scalar_lea.sflag [#allocation4], %s1048
          %s1050 = sand.u32 %s230, 1
          %s1051 = smul.addr %s1050, 8
          %s1052 = scalar_lea.vmem [#allocation8], %s1051
          %1053 = dma.done %s1049, 128
        $region80: #{tpu_custom_call.1} parent=75 // pred_fallthru
          _
      $region76: #{tpu_custom_call.1} parent=5 // pred_fallthru
        _
    $region6: #{tpu_custom_call.1} parent=1 // loop_footer
      %s26 = sadd.s32 1, %s22
    $region7: #{tpu_custom_call.1} parent=1 // loop_footer_branch
      %21 = sbr.rel target = $region3
    $region8: #{tpu_custom_call.1} parent=1 // loop_exit
      _
    %1054 = vsyncpa [#allocation3], 1
    %s1055 = scalar_lea.sflag [#allocation3], 1
    %1056 = vsyncpa %s1055, 1
    %1057 = vsyncpa [#allocation6], 1
    %1058 = vsyncpa [#allocation4], 1
    %s1059 = scalar_lea.sflag [#allocation4], 1
    %1060 = vsyncpa %s1059, 1

</llo_original>
